<compile_context>
chip_gen: v5e
topology: v5e:2x2
jax: 0.10.0
libtpu: 0.0.40
codegen_flags: <defaults>
</compile_context>

<pallas_src>
import functools

import jax
import jax.numpy as jnp
from jax.experimental import pallas as pl
from jax.experimental.pallas import tpu as pltpu

# Large finite negative used for masking / running-max init: avoids
# (-inf) - (-inf) = NaN pitfalls while still underflowing exp() to exactly 0.
_NEG_INF = -1e30


def _head_flash_kernel(xq_ref, xk_ref, wq_ref, wkv_ref, o_ref,
                       q_s, m_s, l_s, acc_s,
                       *, is_decoder, scale, hp, tq, tk):
    # xq_ref : (1, tq, C)    rows of x for this Q tile
    # xk_ref : (1, tk, C)    rows of x for this KV tile
    # wq_ref : (C, hp)       padded Q projection
    # wkv_ref: (C, 2*hp)     padded [K | V] projection (fused)
    # o_ref  : (1, tq, hp)   lane-dense output slab (sliced to H in wrapper)
    qi = pl.program_id(1)
    ki = pl.program_id(2)
    nk = pl.num_programs(2)

    @pl.when(ki == 0)
    def _init():
        # Project the resident Q rows once per (batch, q-tile); lane-dense N=hp.
        q = jax.lax.dot_general(
            xq_ref[0], wq_ref[...],
            dimension_numbers=(((1,), (0,)), ((), ())),
            preferred_element_type=jnp.float32)
        q_s[...] = (q * scale).astype(q_s.dtype)      # pre-scale q once
        m_s[...] = jnp.full_like(m_s, _NEG_INF)
        l_s[...] = jnp.zeros_like(l_s)
        acc_s[...] = jnp.zeros_like(acc_s)

    def _step():
        # Fused K/V projection for this kv tile: one matmul with N = 2*hp lanes.
        kv = jax.lax.dot_general(
            xk_ref[0], wkv_ref[...],
            dimension_numbers=(((1,), (0,)), ((), ())),
            preferred_element_type=jnp.float32)              # (tk, 2*hp) f32
        k = kv[:, :hp].astype(xk_ref.dtype)                  # keep MXU operands narrow
        v = kv[:, hp:].astype(xk_ref.dtype)

        # Scores (tq, tk): contract the head dim of both operands (no k.T).
        s = jax.lax.dot_general(
            q_s[...], k,
            dimension_numbers=(((1,), (1,)), ((), ())),
            preferred_element_type=jnp.float32)

        if is_decoder:
            row = qi * tq + jax.lax.broadcasted_iota(jnp.int32, (tq, tk), 0)
            col = ki * tk + jax.lax.broadcasted_iota(jnp.int32, (tq, tk), 1)
            s = jnp.where(col <= row, s, _NEG_INF)

        # Online softmax update.
        m_prev = m_s[...]
        m_new = jnp.maximum(m_prev, jnp.max(s, axis=-1, keepdims=True))
        alpha = jnp.exp(m_prev - m_new)
        p = jnp.exp(s - m_new)
        l_s[...] = alpha * l_s[...] + jnp.sum(p, axis=-1, keepdims=True)
        acc_s[...] = alpha * acc_s[...] + jax.lax.dot_general(
            p.astype(v.dtype), v,
            dimension_numbers=(((1,), (0,)), ((), ())),
            preferred_element_type=jnp.float32)
        m_s[...] = m_new

    if is_decoder:
        # Skip kv tiles that lie entirely above the causal diagonal.
        pl.when(ki * tk <= qi * tq + (tq - 1))(_step)
    else:
        _step()

    @pl.when(ki == nk - 1)
    def _finalize():
        inv_l = pl.reciprocal(l_s[...], approx=True)   # EUP slot; off the VALU path
        o_ref[0] = (acc_s[...] * inv_l).astype(o_ref.dtype)


def _pick_tile(n, cap):
    if n <= cap:
        return n
    for t in (cap, 256, 128, 64, 32, 16, 8):
        if t <= cap and n % t == 0:
            return t
    return n  # fall back to untiled


def head_forward(x, wk, wq, wv, *, is_decoder=False, q_tile=256, kv_tile=256):
    """x: (B, T, C); wk/wq/wv: (C, H) pre-transposed weights."""
    B, T, C = x.shape
    H = wk.shape[1]
    assert wq.shape == (C, H) and wv.shape == (C, H)

    # Pad head dim to a full lane width (>=128) for lane-dense matmuls / stores.
    hp = max(128, ((H + 127) // 128) * 128)

    def pad_lanes(w):
        return w if H == hp else jnp.pad(w, ((0, 0), (0, hp - H)))

    wq_p = pad_lanes(wq)                                             # (C, hp)
    wkv_p = jnp.concatenate([pad_lanes(wk), pad_lanes(wv)], axis=1)  # (C, 2*hp)

    tq = _pick_tile(T, q_tile)
    tk = _pick_tile(T, kv_tile)
    nq = T // tq
    nk = T // tk
    scale = float(C) ** -0.5

    kernel = functools.partial(_head_flash_kernel, is_decoder=is_decoder,
                               scale=scale, hp=hp, tq=tq, tk=tk)

    # Explicit VMEM budget: double-buffered I/O tiles + scratch, with headroom.
    isz = jnp.dtype(x.dtype).itemsize
    io_bytes = 2 * (tq * C + tk * C + C * hp + C * 2 * hp + tq * hp) * isz
    scratch_bytes = tq * hp * isz + (tq * hp + 2 * tq) * 4
    vmem_limit = int(min(max(2 * (io_bytes + scratch_bytes), 16 << 20), 48 << 20))

    out = pl.pallas_call(
        kernel,
        out_shape=jax.ShapeDtypeStruct((B, T, hp), x.dtype),
        grid_spec=pltpu.PrefetchScalarGridSpec(
            num_scalar_prefetch=0,
            grid=(B, nq, nk),
            in_specs=[
                pl.BlockSpec((1, tq, C), lambda b, qi, ki: (b, qi, 0)),  # x rows for Q
                pl.BlockSpec((1, tk, C), lambda b, qi, ki: (b, ki, 0)),  # x rows for K/V
                pl.BlockSpec((C, hp), lambda b, qi, ki: (0, 0)),         # Wq (padded)
                pl.BlockSpec((C, 2 * hp), lambda b, qi, ki: (0, 0)),     # [Wk|Wv] (padded)
            ],
            out_specs=pl.BlockSpec((1, tq, hp), lambda b, qi, ki: (b, qi, 0)),
            scratch_shapes=[
                pltpu.VMEM((tq, hp), x.dtype),      # q (pre-scaled), resident per q-tile
                pltpu.VMEM((tq, 1), jnp.float32),   # running max
                pltpu.VMEM((tq, 1), jnp.float32),   # running denominator
                pltpu.VMEM((tq, hp), jnp.float32),  # output accumulator
            ]),
        compiler_params=pltpu.CompilerParams(
            dimension_semantics=("parallel", "parallel", "arbitrary"),
            vmem_limit_bytes=vmem_limit),
    )(x, x, wq_p, wkv_p)

    return out[:, :, :H]


def head_reference(x, wk, wq, wv, *, is_decoder=False):
    """Pure-JAX reference matching the PyTorch module (eval mode)."""
    B, T, C = x.shape
    k = x @ wk
    q = x @ wq
    v = x @ wv
    w = (q @ jnp.swapaxes(k, -2, -1)) * (C ** -0.5)
    if is_decoder:
        mask = jnp.tril(jnp.ones((T, T), dtype=bool))
        w = jnp.where(mask, w, -jnp.inf)
    w = jax.nn.softmax(w, axis=-1)
    return w @ v


if __name__ == "__main__":
    n_embd = 128
    head_size = 16
    B, T = 2, 8

    key = jax.random.PRNGKey(0)
    kx, k1, k2, k3 = jax.random.split(key, 4)

    x = jax.random.normal(kx, (B, T, n_embd), dtype=jnp.float32)
    # nn.Linear default init ~ U(-1/sqrt(fan_in), 1/sqrt(fan_in)); weights stored
    # as (C, H) = W.T relative to PyTorch's (H, C).
    bound = 1.0 / (n_embd ** 0.5)
    wk = jax.random.uniform(k1, (n_embd, head_size), jnp.float32, -bound, bound)
    wq = jax.random.uniform(k2, (n_embd, head_size), jnp.float32, -bound, bound)
    wv = jax.random.uniform(k3, (n_embd, head_size), jnp.float32, -bound, bound)

    # Tolerance is set to cover the EUP approximate reciprocal in the finalize step.
    TOL = dict(atol=2e-3, rtol=2e-3)

    # Encoder (no mask) path at the module's implied small shape.
    out = head_forward(x, wk, wq, wv, is_decoder=False)
    jax.block_until_ready(out)
    ref = head_reference(x, wk, wq, wv, is_decoder=False)
    assert out.shape == (B, T, head_size)
    assert jnp.allclose(out, ref, **TOL), "mismatch vs reference (encoder)"

    # Decoder (causal) path.
    out_dec = head_forward(x, wk, wq, wv, is_decoder=True)
    jax.block_until_ready(out_dec)
    ref_dec = head_reference(x, wk, wq, wv, is_decoder=True)
    assert jnp.allclose(out_dec, ref_dec, **TOL), "mismatch vs reference (decoder)"

    # Exercise the multi-tile flash path (nq = nk = 2) including causal tile skipping.
    T2 = 256
    x2 = jax.random.normal(jax.random.PRNGKey(1), (B, T2, n_embd), dtype=jnp.float32)
    out2 = head_forward(x2, wk, wq, wv, is_decoder=True, q_tile=128, kv_tile=128)
    jax.block_until_ready(out2)
    ref2 = head_reference(x2, wk, wq, wv, is_decoder=True)
    assert jnp.allclose(out2, ref2, **TOL), "mismatch vs reference (tiled decoder)"

    print("KERNEL_OK")
</pallas_src>

<mosaic_0001>
module attributes {stable_mosaic.version = 11 : i64} {
  func.func @_head_flash_kernel(%arg0: i32, %arg1: i32, %arg2: i32, %arg3: memref<1x8x128xf32, #tpu.memory_space<vmem>>, %arg4: memref<1x8x128xf32, #tpu.memory_space<vmem>>, %arg5: memref<128x128xf32, #tpu.memory_space<vmem>>, %arg6: memref<128x256xf32, #tpu.memory_space<vmem>>, %arg7: memref<1x8x128xf32, #tpu.memory_space<vmem>>, %arg8: memref<8x128xf32, #tpu.memory_space<vmem>>, %arg9: memref<8x1xf32, #tpu.memory_space<vmem>>, %arg10: memref<8x1xf32, #tpu.memory_space<vmem>>, %arg11: memref<8x128xf32, #tpu.memory_space<vmem>>) attributes {dimension_semantics = [#tpu.dimension_semantics<parallel>, #tpu.dimension_semantics<parallel>, #tpu.dimension_semantics<arbitrary>], iteration_bounds = array<i64: 2, 1, 1>, scalar_prefetch = 0 : i64, scratch_operands = 4 : i64, tpu.core_type = #tpu.core_type<tc>, window_params = [{transform_indices = @transform_0, window_bounds = array<i64: 1, 8, 128>}, {transform_indices = @transform_1, window_bounds = array<i64: 1, 8, 128>}, {pipeline_mode = #tpu.pipeline_mode<synchronous>, transform_indices = @transform_2, window_bounds = array<i64: 128, 128>}, {pipeline_mode = #tpu.pipeline_mode<synchronous>, transform_indices = @transform_3, window_bounds = array<i64: 128, 256>}, {transform_indices = @transform_4, window_bounds = array<i64: 1, 8, 128>}]} {
    %c0_i32 = arith.constant 0 : i32
    %0 = arith.cmpi eq, %arg2, %c0_i32 : i32
    %1 = arith.extui %0 : i1 to i32
    %c0_i32_0 = arith.constant 0 : i32
    %2 = arith.cmpi ne, %1, %c0_i32_0 : i32
    scf.if %2 {
      %c0_25 = arith.constant 0 : index
      %c0_26 = arith.constant 0 : index
      %c0_27 = arith.constant 0 : index
      %36 = vector.load %arg3[%c0_25, %c0_26, %c0_27] : memref<1x8x128xf32, #tpu.memory_space<vmem>>, vector<1x8x128xf32>
      %37 = vector.shape_cast %36 : vector<1x8x128xf32> to vector<8x128xf32>
      %c0_28 = arith.constant 0 : index
      %c0_29 = arith.constant 0 : index
      %38 = vector.load %arg5[%c0_28, %c0_29] : memref<128x128xf32, #tpu.memory_space<vmem>>, vector<128x128xf32>
      %cst_30 = arith.constant dense<0.000000e+00> : vector<8x128xf32>
      %39 = tpu.matmul %37, %38, %cst_30 {dimension_numbers = #tpu.dot_dimension_numbers<[1], [0], [0], [1], [0, 0, 1, 1], [], []>} : vector<8x128xf32>, vector<128x128xf32>, vector<8x128xf32> -> vector<8x128xf32>
      %cst_31 = arith.constant 0.0883883461 : f32
      %40 = vector.broadcast %cst_31 : f32 to vector<8x128xf32>
      %41 = arith.mulf %39, %40 : vector<8x128xf32>
      %c0_32 = arith.constant 0 : index
      %c0_33 = arith.constant 0 : index
      %42 = vector.load %arg8[%c0_32, %c0_33] : memref<8x128xf32, #tpu.memory_space<vmem>>, vector<8x128xf32>
      tpu.vector_store %arg8[%c0_32, %c0_33], %41 {strides = array<i32>} : memref<8x128xf32, #tpu.memory_space<vmem>>, vector<8x128xf32>,
      %cst_34 = arith.constant -1.000000e+30 : f32
      %43 = vector.broadcast %cst_34 : f32 to vector<8x1xf32>
      %c0_35 = arith.constant 0 : index
      %c0_36 = arith.constant 0 : index
      %44 = vector.load %arg9[%c0_35, %c0_36] : memref<8x1xf32, #tpu.memory_space<vmem>>, vector<8x1xf32>
      tpu.vector_store %arg9[%c0_35, %c0_36], %43 {strides = array<i32>} : memref<8x1xf32, #tpu.memory_space<vmem>>, vector<8x1xf32>,
      %cst_37 = arith.constant 0.000000e+00 : f32
      %45 = vector.broadcast %cst_37 : f32 to vector<8x1xf32>
      %c0_38 = arith.constant 0 : index
      %c0_39 = arith.constant 0 : index
      %46 = vector.load %arg10[%c0_38, %c0_39] : memref<8x1xf32, #tpu.memory_space<vmem>>, vector<8x1xf32>
      tpu.vector_store %arg10[%c0_38, %c0_39], %45 {strides = array<i32>} : memref<8x1xf32, #tpu.memory_space<vmem>>, vector<8x1xf32>,
      %cst_40 = arith.constant 0.000000e+00 : f32
      %47 = vector.broadcast %cst_40 : f32 to vector<8x128xf32>
      %c0_41 = arith.constant 0 : index
      %c0_42 = arith.constant 0 : index
      %48 = vector.load %arg11[%c0_41, %c0_42] : memref<8x128xf32, #tpu.memory_space<vmem>>, vector<8x128xf32>
      tpu.vector_store %arg11[%c0_41, %c0_42], %47 {strides = array<i32>} : memref<8x128xf32, #tpu.memory_space<vmem>>, vector<8x128xf32>,
    } else {
    }
    %c0 = arith.constant 0 : index
    %c0_1 = arith.constant 0 : index
    %c0_2 = arith.constant 0 : index
    %3 = vector.load %arg4[%c0, %c0_1, %c0_2] : memref<1x8x128xf32, #tpu.memory_space<vmem>>, vector<1x8x128xf32>
    %4 = vector.shape_cast %3 : vector<1x8x128xf32> to vector<8x128xf32>
    %c0_3 = arith.constant 0 : index
    %c0_4 = arith.constant 0 : index
    %5 = vector.load %arg6[%c0_3, %c0_4] : memref<128x256xf32, #tpu.memory_space<vmem>>, vector<128x256xf32>
    %cst = arith.constant dense<0.000000e+00> : vector<8x256xf32>
    %6 = tpu.matmul %4, %5, %cst {dimension_numbers = #tpu.dot_dimension_numbers<[1], [0], [0], [1], [0, 0, 1, 1], [], []>} : vector<8x128xf32>, vector<128x256xf32>, vector<8x256xf32> -> vector<8x256xf32>
    %7 = vector.extract_strided_slice %6 {offsets = [0, 0], sizes = [8, 128], strides = [1, 1]} : vector<8x256xf32> to vector<8x128xf32>
    %8 = vector.extract_strided_slice %6 {offsets = [0, 128], sizes = [8, 128], strides = [1, 1]} : vector<8x256xf32> to vector<8x128xf32>
    %c0_5 = arith.constant 0 : index
    %c0_6 = arith.constant 0 : index
    %9 = vector.load %arg8[%c0_5, %c0_6] : memref<8x128xf32, #tpu.memory_space<vmem>>, vector<8x128xf32>
    %cst_7 = arith.constant dense<0.000000e+00> : vector<8x8xf32>
    %10 = tpu.matmul %9, %7, %cst_7 {dimension_numbers = #tpu.dot_dimension_numbers<[1], [1], [0], [0], [0, 0, 1, 0], [], []>} : vector<8x128xf32>, vector<8x128xf32>, vector<8x8xf32> -> vector<8x8xf32>
    %c0_8 = arith.constant 0 : index
    %c0_9 = arith.constant 0 : index
    %11 = vector.load %arg9[%c0_8, %c0_9] : memref<8x1xf32, #tpu.memory_space<vmem>>, vector<8x1xf32>
    %cst_10 = arith.constant dense<0xFF800000> : vector<8xf32>
    %12 = vector.multi_reduction <maximumf>, %10, %cst_10 [1] : vector<8x8xf32> to vector<8xf32>
    %13 = vector.shape_cast %12 : vector<8xf32> to vector<8x1xf32>
    %14 = arith.maximumf %11, %13 : vector<8x1xf32>
    %15 = arith.subf %11, %14 : vector<8x1xf32>
    %16 = math.exp %15 : vector<8x1xf32>
    %17 = vector.broadcast %14 : vector<8x1xf32> to vector<8x8xf32>
    %18 = arith.subf %10, %17 : vector<8x8xf32>
    %19 = math.exp %18 : vector<8x8xf32>
    %c0_11 = arith.constant 0 : index
    %c0_12 = arith.constant 0 : index
    %20 = vector.load %arg10[%c0_11, %c0_12] : memref<8x1xf32, #tpu.memory_space<vmem>>, vector<8x1xf32>
    %21 = arith.mulf %16, %20 : vector<8x1xf32>
    %cst_13 = arith.constant dense<0.000000e+00> : vector<8xf32>
    %22 = vector.multi_reduction <add>, %19, %cst_13 [1] : vector<8x8xf32> to vector<8xf32>
    %23 = vector.shape_cast %22 : vector<8xf32> to vector<8x1xf32>
    %24 = arith.addf %21, %23 : vector<8x1xf32>
    %c0_14 = arith.constant 0 : index
    %c0_15 = arith.constant 0 : index
    %25 = vector.load %arg10[%c0_14, %c0_15] : memref<8x1xf32, #tpu.memory_space<vmem>>, vector<8x1xf32>
    tpu.vector_store %arg10[%c0_14, %c0_15], %24 {strides = array<i32>} : memref<8x1xf32, #tpu.memory_space<vmem>>, vector<8x1xf32>,
    %c0_16 = arith.constant 0 : index
    %c0_17 = arith.constant 0 : index
    %26 = vector.load %arg11[%c0_16, %c0_17] : memref<8x128xf32, #tpu.memory_space<vmem>>, vector<8x128xf32>
    %27 = vector.broadcast %16 : vector<8x1xf32> to vector<8x128xf32>
    %28 = arith.mulf %27, %26 : vector<8x128xf32>
    %cst_18 = arith.constant dense<0.000000e+00> : vector<8x128xf32>
    %29 = tpu.matmul %19, %8, %cst_18 {dimension_numbers = #tpu.dot_dimension_numbers<[1], [0], [0], [1], [0, 0, 1, 1], [], []>} : vector<8x8xf32>, vector<8x128xf32>, vector<8x128xf32> -> vector<8x128xf32>
    %30 = arith.addf %28, %29 : vector<8x128xf32>
    %c0_19 = arith.constant 0 : index
    %c0_20 = arith.constant 0 : index
    %31 = vector.load %arg11[%c0_19, %c0_20] : memref<8x128xf32, #tpu.memory_space<vmem>>, vector<8x128xf32>
    tpu.vector_store %arg11[%c0_19, %c0_20], %30 {strides = array<i32>} : memref<8x128xf32, #tpu.memory_space<vmem>>, vector<8x128xf32>,
    %c0_21 = arith.constant 0 : index
    %c0_22 = arith.constant 0 : index
    %32 = vector.load %arg9[%c0_21, %c0_22] : memref<8x1xf32, #tpu.memory_space<vmem>>, vector<8x1xf32>
    tpu.vector_store %arg9[%c0_21, %c0_22], %14 {strides = array<i32>} : memref<8x1xf32, #tpu.memory_space<vmem>>, vector<8x1xf32>,
    %c0_i32_23 = arith.constant 0 : i32
    %33 = arith.cmpi eq, %arg2, %c0_i32_23 : i32
    %34 = arith.extui %33 : i1 to i32
    %c0_i32_24 = arith.constant 0 : i32
    %35 = arith.cmpi ne, %34, %c0_i32_24 : i32
    scf.if %35 {
      %c0_25 = arith.constant 0 : index
      %c0_26 = arith.constant 0 : index
      %36 = vector.load %arg10[%c0_25, %c0_26] : memref<8x1xf32, #tpu.memory_space<vmem>>, vector<8x1xf32>
      %37 = tpu.reciprocal %36 {approx = true} : vector<8x1xf32> -> vector<8x1xf32>
      %c0_27 = arith.constant 0 : index
      %c0_28 = arith.constant 0 : index
      %38 = vector.load %arg11[%c0_27, %c0_28] : memref<8x128xf32, #tpu.memory_space<vmem>>, vector<8x128xf32>
      %39 = vector.broadcast %37 : vector<8x1xf32> to vector<8x128xf32>
      %40 = arith.mulf %38, %39 : vector<8x128xf32>
      %c0_29 = arith.constant 0 : index
      %c0_30 = arith.constant 0 : index
      %c0_31 = arith.constant 0 : index
      %41 = vector.load %arg7[%c0_29, %c0_30, %c0_31] : memref<1x8x128xf32, #tpu.memory_space<vmem>>, vector<1x8x128xf32>
      %42 = vector.shape_cast %41 : vector<1x8x128xf32> to vector<8x128xf32>
      %43 = vector.shape_cast %40 : vector<8x128xf32> to vector<1x8x128xf32>
      tpu.vector_store %arg7[%c0_29, %c0_30, %c0_31], %43 {strides = array<i32>} : memref<1x8x128xf32, #tpu.memory_space<vmem>>, vector<1x8x128xf32>,
    } else {
    }
    return
  }
  func.func @transform_0(%arg0: i32, %arg1: i32, %arg2: i32) -> (i32, i32, i32) {
    %c0_i32 = arith.constant 0 : i32
    %c0_i32_0 = arith.constant 0 : i32
    return %arg0, %arg1, %c0_i32 : i32, i32, i32
  }
  func.func @transform_1(%arg0: i32, %arg1: i32, %arg2: i32) -> (i32, i32, i32) {
    %c0_i32 = arith.constant 0 : i32
    %c0_i32_0 = arith.constant 0 : i32
    return %arg0, %arg2, %c0_i32 : i32, i32, i32
  }
  func.func @transform_2(%arg0: i32, %arg1: i32, %arg2: i32) -> (i32, i32) {
    %c0_i32 = arith.constant 0 : i32
    %c0_i32_0 = arith.constant 0 : i32
    %c0_i32_1 = arith.constant 0 : i32
    return %c0_i32, %c0_i32_0 : i32, i32
  }
  func.func @transform_3(%arg0: i32, %arg1: i32, %arg2: i32) -> (i32, i32) {
    %c0_i32 = arith.constant 0 : i32
    %c0_i32_0 = arith.constant 0 : i32
    %c0_i32_1 = arith.constant 0 : i32
    return %c0_i32, %c0_i32_0 : i32, i32
  }
  func.func @transform_4(%arg0: i32, %arg1: i32, %arg2: i32) -> (i32, i32, i32) {
    %c0_i32 = arith.constant 0 : i32
    %c0_i32_0 = arith.constant 0 : i32
    return %arg0, %arg1, %c0_i32 : i32, i32, i32
  }
}

</mosaic_0001>

<llo_original>
// kernel: tpu_custom_call.1
$region0: #{tpu_custom_call.1}
  #allocation0 [shape = 'u32[]', space=smem, size = 0x4, offset = 0x4, fixed_abs, tag = 'smem constant byte address 0x4 - core index']
  #allocation1 [shape = 'u32[72,128]{1,0:T(1,128)}', space=vmem, size = 0x9000, scoped, tag = 'internal scratch']
  #allocation2 [shape = 'f32[8,128]{1,0:T(8,128)}', space=vmem, size = 0x1000, scoped, tag = 'scratch operand']
  #allocation3 [shape = 'f32[8,1]{1,0:T(8,128)}', space=vmem, size = 0x1000, scoped, tag = 'scratch operand']
  #allocation4 [shape = 'f32[8,1]{1,0:T(8,128)}', space=vmem, size = 0x1000, scoped, tag = 'scratch operand']
  #allocation5 [shape = 'f32[8,128]{1,0:T(8,128)}', space=vmem, size = 0x1000, scoped, tag = 'scratch operand']
  %s0 = inlined_call_operand.hbm [shape: f32[2,8,128], index: 0, kind: input, shape index: {}]
  %s1 = inlined_call_operand.hbm [shape: f32[2,8,128], index: 1, kind: input, shape index: {}]
  %s2 = inlined_call_operand.hbm [shape: f32[128,128], index: 2, kind: input, shape index: {}]
  %s3 = inlined_call_operand.hbm [shape: f32[128,256], index: 3, kind: input, shape index: {}]
  %s4 = inlined_call_operand.hbm [shape: f32[2,8,128], index: 4, kind: output, shape index: {}]
  %s5 = sld [smem:[#allocation0]]
  $region73: #{tpu_custom_call.1} parent=0
    _
  %s7 = ssub.s32 1, %s5
  %s8 = scalar_select 0, %s7, %s5
  $region1: #{tpu_custom_call.1} parent=0
    #allocation6 [shape = 'u8[8192]{0}', space=vmem, size = 0x2000, scoped, tag = 'input window, operand 0']
    #allocation7 [shape = 's32[2]{0}', space=sflag, size = 0x8, scoped, tag = 'scoped memory for tpu_custom_call.1']
    #allocation8 [shape = 's32[2]{0}', space=sflag, size = 0x8, scoped, tag = 'scoped memory for tpu_custom_call.1']
    #allocation9 [shape = 'u8[8192]{0}', space=vmem, size = 0x2000, scoped, tag = 'input window, operand 1']
    #allocation10 [shape = 's32[2]{0}', space=sflag, size = 0x8, scoped, tag = 'scoped memory for tpu_custom_call.1']
    #allocation11 [shape = 'u8[65536]{0}', space=vmem, size = 0x10000, scoped, tag = 'input window, operand 2, single buffered']
    #allocation12 [shape = 'u8[131072]{0}', space=vmem, size = 0x20000, scoped, tag = 'input window, operand 3, single buffered']
    #allocation13 [shape = 's32[1]{0}', space=sflag, size = 0x4, scoped, tag = 'scoped memory for tpu_custom_call.1']
    #allocation14 [shape = 'u8[8192]{0}', space=vmem, size = 0x2000, scoped, tag = 'output window, operand 0']
    %9 = vsyncpa [#allocation7], 0
    %s10 = scalar_lea.sflag [#allocation7], 1
    %11 = vsyncpa %s10, 0
    %12 = vsyncpa [#allocation10], 0
    %s13 = scalar_lea.sflag [#allocation10], 1
    %14 = vsyncpa %s13, 0
    %15 = vsyncpa [#allocation13], 0
    %16 = vsyncpa [#allocation8], 0
    %s17 = scalar_lea.sflag [#allocation8], 1
    %18 = vsyncpa %s17, 0
    loop: start=0, step=1, limit=4
    $region2: #{tpu_custom_call.1} parent=1 // loop_pre_header
      _
    $region3: #{tpu_custom_call.1} parent=1 // loop_header
      %s20 = sphi 0, %s24
      %p21 = scmp.ge.s32.totalorder %s20, 4
      %s27 = sphi 0, %s46
      %s28 = sphi 0, %s42
      %s29 = sphi 0, %s38
      %s30 = sphi 0, %s27
      %s31 = sphi 0, %s28
      %s32 = sphi 0, %s29
      %s33 = sphi 0, %s30
      %s34 = sphi 0, %s31
      %s35 = sphi 0, %s32
      %s51 = sphi 0, %s53
      %s54 = sphi 0, %s51
      %s55 = sphi 0, %s54
      %s71 = sphi 0, %s55
      %s79 = sphi 0, %s81
      %s82 = sphi 0, %s79
      %s83 = sphi 0, %s82
      %s99 = sphi 0, %s83
      %s103 = sphi 0, %s103
      %s105 = sphi 0, %s103
      %s106 = sphi 0, %s105
      %s120 = sphi 0, %s106
      %s124 = sphi 0, %s124
      %s126 = sphi 0, %s124
      %s127 = sphi 0, %s126
      %s141 = sphi 0, %s127
      %s149 = sphi 0, %s151
      %s152 = sphi 0, %s149
      %s153 = sphi 0, %s152
      %s169 = sphi 0, %s153
    $region4: #{tpu_custom_call.1} parent=1 // loop_header_branch
      %23 = sbr.rel (%p21) target = $region8
    $region5: #{tpu_custom_call.1} parent=1 // loop_body
      %s25 = ssub.s32 %s20, 1
      %s26 = ssub.s32 %s20, 2
      %s36 = sadd.s32 1, %s29
      %p37 = scmp.ge.s32.totalorder %s36, 1
      %s38 = scalar_select %p37, 0, %s36
      %s39 = sadd.s32 1, %s28
      %s40 = scalar_select %p37, %s39, %s28
      %p41 = scmp.ge.s32.totalorder %s40, 1
      %s42 = scalar_select %p41, 0, %s40
      %s43 = sadd.s32 1, %s27
      %s44 = scalar_select %p41, %s43, %s27
      %p45 = scmp.ge.s32.totalorder %s44, 2
      %s46 = scalar_select %p45, 0, %s44
      %s47 = ssub.s32 %s27, %s46
      %s48 = ssub.s32 %s28, %s42
      %s49 = sor.u32 %s47, %s48
      %p50 = scmp.eq.s32.totalorder %s49, 0
      %s52 = sadd.s32 %s51, 1
      %s53 = scalar_select %p50, %s51, %s52
      %p56 = pneg %p50
      %p57 = scmp.eq.s32.totalorder %s20, 1
      %p58 = por %p56, %p57
      %p59 = scmp.ne.s32.totalorder %s51, %s54
      %p60 = scmp.eq.s32.totalorder %s20, 0
      %p61 = por %p59, %p60
      %p62 = scmp.ne.s32.totalorder %s51, %s54
      %p63 = scmp.eq.s32.totalorder %s25, 1
      %p64 = por %p62, %p63
      %p65 = scmp.ne.s32.totalorder %s54, %s55
      %p66 = scmp.eq.s32.totalorder %s25, 0
      %p67 = por %p65, %p66
      %p68 = scmp.ne.s32.totalorder %s54, %s55
      %p69 = scmp.eq.s32.totalorder %s26, 1
      %p70 = por %p68, %p69
      %p72 = scmp.ne.s32.totalorder %s55, %s71
      %p73 = scmp.eq.s32.totalorder %s26, 0
      %p74 = por %p72, %p73
      %s75 = ssub.s32 %s27, %s46
      %s76 = ssub.s32 %s29, %s38
      %s77 = sor.u32 %s75, %s76
      %p78 = scmp.eq.s32.totalorder %s77, 0
      %s80 = sadd.s32 %s79, 1
      %s81 = scalar_select %p78, %s79, %s80
      %p84 = pneg %p78
      %p85 = scmp.eq.s32.totalorder %s20, 1
      %p86 = por %p84, %p85
      %p87 = scmp.ne.s32.totalorder %s79, %s82
      %p88 = scmp.eq.s32.totalorder %s20, 0
      %p89 = por %p87, %p88
      %p90 = scmp.ne.s32.totalorder %s79, %s82
      %p91 = scmp.eq.s32.totalorder %s25, 1
      %p92 = por %p90, %p91
      %p93 = scmp.ne.s32.totalorder %s82, %s83
      %p94 = scmp.eq.s32.totalorder %s25, 0
      %p95 = por %p93, %p94
      %p96 = scmp.ne.s32.totalorder %s82, %s83
      %p97 = scmp.eq.s32.totalorder %s26, 1
      %p98 = por %p96, %p97
      %p100 = scmp.ne.s32.totalorder %s83, %s99
      %p101 = scmp.eq.s32.totalorder %s26, 0
      %p102 = por %p100, %p101
      %s104 = sadd.s32 %s103, 1
      %p107 = scmp.eq.s32.totalorder %s20, 1
      %p108 = scmp.ne.s32.totalorder %s103, %s105
      %p109 = scmp.eq.s32.totalorder %s20, 0
      %p110 = por %p108, %p109
      %p111 = scmp.ne.s32.totalorder %s103, %s105
      %p112 = scmp.eq.s32.totalorder %s25, 1
      %p113 = por %p111, %p112
      %p114 = scmp.ne.s32.totalorder %s105, %s106
      %p115 = scmp.eq.s32.totalorder %s25, 0
      %p116 = por %p114, %p115
      %p117 = scmp.ne.s32.totalorder %s105, %s106
      %p118 = scmp.eq.s32.totalorder %s26, 1
      %p119 = por %p117, %p118
      %p121 = scmp.ne.s32.totalorder %s106, %s120
      %p122 = scmp.eq.s32.totalorder %s26, 0
      %p123 = por %p121, %p122
      %s125 = sadd.s32 %s124, 1
      %p128 = scmp.eq.s32.totalorder %s20, 1
      %p129 = scmp.ne.s32.totalorder %s124, %s126
      %p130 = scmp.eq.s32.totalorder %s20, 0
      %p131 = por %p129, %p130
      %p132 = scmp.ne.s32.totalorder %s124, %s126
      %p133 = scmp.eq.s32.totalorder %s25, 1
      %p134 = por %p132, %p133
      %p135 = scmp.ne.s32.totalorder %s126, %s127
      %p136 = scmp.eq.s32.totalorder %s25, 0
      %p137 = por %p135, %p136
      %p138 = scmp.ne.s32.totalorder %s126, %s127
      %p139 = scmp.eq.s32.totalorder %s26, 1
      %p140 = por %p138, %p139
      %p142 = scmp.ne.s32.totalorder %s127, %s141
      %p143 = scmp.eq.s32.totalorder %s26, 0
      %p144 = por %p142, %p143
      %s145 = ssub.s32 %s27, %s46
      %s146 = ssub.s32 %s28, %s42
      %s147 = sor.u32 %s145, %s146
      %p148 = scmp.eq.s32.totalorder %s147, 0
      %s150 = sadd.s32 %s149, 1
      %s151 = scalar_select %p148, %s149, %s150
      %p154 = pneg %p148
      %p155 = scmp.eq.s32.totalorder %s20, 1
      %p156 = por %p154, %p155
      %p157 = scmp.ne.s32.totalorder %s149, %s152
      %p158 = scmp.eq.s32.totalorder %s20, 0
      %p159 = por %p157, %p158
      %p160 = scmp.ne.s32.totalorder %s149, %s152
      %p161 = scmp.eq.s32.totalorder %s25, 1
      %p162 = por %p160, %p161
      %p163 = scmp.ne.s32.totalorder %s152, %s153
      %p164 = scmp.eq.s32.totalorder %s25, 0
      %p165 = por %p163, %p164
      %p166 = scmp.ne.s32.totalorder %s152, %s153
      %p167 = scmp.eq.s32.totalorder %s26, 1
      %p168 = por %p166, %p167
      %p170 = scmp.ne.s32.totalorder %s153, %s169
      %p171 = scmp.eq.s32.totalorder %s26, 0
      %p172 = por %p170, %p171
      %p173 = scmp.le.s32.totalorder 1, %s20
      %p174 = scmp.lt.s32.totalorder %s20, 3
      %p175 = pnand %p173, %p174
      %p176 = pneg %p175
      // Predicated region
      $region9: #{tpu_custom_call.1} parent=5 // pred_check
        _
      $region10: #{tpu_custom_call.1} parent=5 // pred_check_branch
        %178 = sbr.rel (%p175) target = $region12
      $region11: #{tpu_custom_call.1} parent=5 // pred_region
        %s179 = ssub.s32 %s20, 1
        // Predicated region
        $region13: #{tpu_custom_call.1} parent=11 // pred_check
          %p180 = pneg %p116
        $region14: #{tpu_custom_call.1} parent=11 // pred_check_branch
          %182 = sbr.rel (%p180) target = $region16
        $region15: #{tpu_custom_call.1} parent=11 // pred_region
          %184 = vsyncadd [#allocation10], 0
          %s185 = sshll.u32 %s2, 4
          %s186 = int_to_ptr.hbm [resolvable:$true] %s185
          %s187 = sshll.u32 [#allocation11], 4
          %s188 = int_to_ptr.vmem [resolvable:$true] %s187
          %193 = dma.hbm_to_vmem [thread:$0]  %s186, 2048, %s188, [#allocation10], 128, 128, 8
        $region16: #{tpu_custom_call.1} parent=11 // pred_fallthru
          _
        // Predicated region
        $region17: #{tpu_custom_call.1} parent=11 // pred_check
          %p194 = pneg %p137
        $region18: #{tpu_custom_call.1} parent=11 // pred_check_branch
          %196 = sbr.rel (%p194) target = $region20
        $region19: #{tpu_custom_call.1} parent=11 // pred_region
          %198 = vsyncadd [#allocation13], 0
          %s199 = sshll.u32 %s3, 4
          %s200 = int_to_ptr.hbm [resolvable:$true] %s199
          %s201 = sshll.u32 [#allocation12], 4
          %s202 = int_to_ptr.vmem [resolvable:$true] %s201
          %207 = dma.hbm_to_vmem [thread:$0]  %s200, 4096, %s202, [#allocation13], 256, 256, 16
        $region20: #{tpu_custom_call.1} parent=11 // pred_fallthru
          _
      $region12: #{tpu_custom_call.1} parent=5 // pred_fallthru
        _
      %p208 = scmp.lt.s32.totalorder %s20, 2
      // Predicated region
      $region21: #{tpu_custom_call.1} parent=5 // pred_check
        %p209 = pneg %p208
      $region22: #{tpu_custom_call.1} parent=5 // pred_check_branch
        %211 = sbr.rel (%p209) target = $region24
      $region23: #{tpu_custom_call.1} parent=5 // pred_region
        // Predicated region
        $region25: #{tpu_custom_call.1} parent=23 // pred_check
          %p212 = pneg %p61
        $region26: #{tpu_custom_call.1} parent=23 // pred_check_branch
          %214 = sbr.rel (%p212) target = $region28
        $region27: #{tpu_custom_call.1} parent=23 // pred_region
          %s215 = sand.u32 %s51, 1
          %s216 = scalar_lea.sflag [#allocation7], %s215
          %s217 = sand.u32 %s51, 1
          %s218 = smul.addr %s217, 8
          %s219 = scalar_lea.vmem [#allocation6], %s218
          %221 = vsyncadd %s216, 0
          %s222 = sadd.s32 %s28, %s27
          %s223 = smul.addr %s222, 8
          %s224 = scalar_lea.hbm %s0, %s223
          %s226 = sshll.u32 %s224, 4
          %s227 = int_to_ptr.hbm [resolvable:$true] %s226
          %s228 = sshll.u32 %s219, 4
          %s229 = int_to_ptr.vmem [resolvable:$true] %s228
          %231 = dma.hbm_to_vmem [thread:$0]  %s227, 128, %s229, %s216
        $region28: #{tpu_custom_call.1} parent=23 // pred_fallthru
          _
        // Predicated region
        $region29: #{tpu_custom_call.1} parent=23 // pred_check
          %p232 = pneg %p89
        $region30: #{tpu_custom_call.1} parent=23 // pred_check_branch
          %234 = sbr.rel (%p232) target = $region32
        $region31: #{tpu_custom_call.1} parent=23 // pred_region
          %s235 = sand.u32 %s20, 1
          %s236 = scalar_lea.sflag [#allocation10], %s235
          %s237 = sand.u32 %s79, 1
          %s238 = smul.addr %s237, 8
          %s239 = scalar_lea.vmem [#allocation9], %s238
          %241 = vsyncadd %s236, 0
          %s242 = sadd.s32 %s29, %s27
          %s243 = smul.addr %s242, 8
          %s244 = scalar_lea.hbm %s1, %s243
          %s246 = sshll.u32 %s244, 4
          %s247 = int_to_ptr.hbm [resolvable:$true] %s246
          %s248 = sshll.u32 %s239, 4
          %s249 = int_to_ptr.vmem [resolvable:$true] %s248
          %251 = dma.hbm_to_vmem [thread:$0]  %s247, 128, %s249, %s236
        $region32: #{tpu_custom_call.1} parent=23 // pred_fallthru
          _
      $region24: #{tpu_custom_call.1} parent=5 // pred_fallthru
        _
      %p252 = scmp.le.s32.totalorder 1, %s20
      %p253 = scmp.lt.s32.totalorder %s20, 3
      %p254 = pnand %p252, %p253
      %p255 = pneg %p254
      // Predicated region
      $region33: #{tpu_custom_call.1} parent=5 // pred_check
        _
      $region34: #{tpu_custom_call.1} parent=5 // pred_check_branch
        %257 = sbr.rel (%p254) target = $region36
      $region35: #{tpu_custom_call.1} parent=5 // pred_region
        %s258 = ssub.s32 %s20, 1
        %s259 = sand.u32 %s54, 1
        %s260 = scalar_lea.sflag [#allocation7], %s259
        %s261 = sand.u32 %s54, 1
        %s262 = smul.addr %s261, 8
        %s263 = scalar_lea.vmem [#allocation6], %s262
        // Predicated region
        $region37: #{tpu_custom_call.1} parent=35 // pred_check
          %p264 = pneg %p67
        $region38: #{tpu_custom_call.1} parent=35 // pred_check_branch
          %266 = sbr.rel (%p264) target = $region40
        $region39: #{tpu_custom_call.1} parent=35 // pred_region
          %268 = dma.done %s260, 128
        $region40: #{tpu_custom_call.1} parent=35 // pred_fallthru
          _
        %s269 = sand.u32 %s25, 1
        %s270 = scalar_lea.sflag [#allocation10], %s269
        %s271 = sand.u32 %s82, 1
        %s272 = smul.addr %s271, 8
        %s273 = scalar_lea.vmem [#allocation9], %s272
        // Predicated region
        $region41: #{tpu_custom_call.1} parent=35 // pred_check
          %p274 = pneg %p95
        $region42: #{tpu_custom_call.1} parent=35 // pred_check_branch
          %276 = sbr.rel (%p274) target = $region44
        $region43: #{tpu_custom_call.1} parent=35 // pred_region
          %278 = dma.done %s270, 128
        $region44: #{tpu_custom_call.1} parent=35 // pred_fallthru
          _
        // Predicated region
        $region45: #{tpu_custom_call.1} parent=35 // pred_check
          %p279 = pneg %p116
        $region46: #{tpu_custom_call.1} parent=35 // pred_check_branch
          %281 = sbr.rel (%p279) target = $region48
        $region47: #{tpu_custom_call.1} parent=35 // pred_region
          %283 = dma.done [#allocation10], 2048
        $region48: #{tpu_custom_call.1} parent=35 // pred_fallthru
          _
        // Predicated region
        $region49: #{tpu_custom_call.1} parent=35 // pred_check
          %p284 = pneg %p137
        $region50: #{tpu_custom_call.1} parent=35 // pred_check_branch
          %286 = sbr.rel (%p284) target = $region52
        $region51: #{tpu_custom_call.1} parent=35 // pred_region
          %288 = dma.done [#allocation13], 4096
        $region52: #{tpu_custom_call.1} parent=35 // pred_fallthru
          _
        %s289 = sand.u32 %s54, 1
        %s290 = scalar_lea.sflag [#allocation7], %s289
        %s291 = sand.u32 %s54, 1
        %s292 = smul.addr %s291, 8
        %s293 = scalar_lea.vmem [#allocation6], %s292
        %p294 = pneg %p67
        %p295 = pneg %p64
        %s296 = sand.u32 %s25, 1
        %s297 = scalar_lea.sflag [#allocation10], %s296
        %s298 = sand.u32 %s82, 1
        %s299 = smul.addr %s298, 8
        %s300 = scalar_lea.vmem [#allocation9], %s299
        %p301 = pneg %p95
        %p302 = pneg %p92
        %p303 = pneg %p116
        %p304 = pneg %p113
        %p305 = pneg %p137
        %p306 = pneg %p134
        %p307 = pneg %p165
        %p308 = pneg %p162
        %s309 = sand.u32 %s152, 1
        %s310 = scalar_lea.sflag [#allocation8], %s309
        %s311 = sand.u32 %s152, 1
        %s312 = smul.addr %s311, 8
        %s313 = scalar_lea.vmem [#allocation14], %s312
        %p314 = scmp.eq.s32.totalorder %s32, 0
        // Predicated region
        $region53: #{tpu_custom_call.1} parent=35 // pred_check
          %p315 = pneg %p314
        $region54: #{tpu_custom_call.1} parent=35 // pred_check_branch
          %317 = sbr.rel (%p315) target = $region56
        $region55: #{tpu_custom_call.1} parent=35 // pred_region
          %v318 = vld [vmem:[%s263] sm:$0xff]
          %v319 = vld [vmem:[#allocation11] sm:$0xff]
          %v320 = vld [vmem:[#allocation11 + $0x8] sm:$0xff]
          %v321 = vld [vmem:[#allocation11 + $0x10] sm:$0xff]
          %v322 = vld [vmem:[#allocation11 + $0x18] sm:$0xff]
          %v323 = vld [vmem:[#allocation11 + $0x20] sm:$0xff]
          %v324 = vld [vmem:[#allocation11 + $0x28] sm:$0xff]
          %v325 = vld [vmem:[#allocation11 + $0x30] sm:$0xff]
          %v326 = vld [vmem:[#allocation11 + $0x38] sm:$0xff]
          %v327 = vld [vmem:[#allocation11 + $0x40] sm:$0xff]
          %v328 = vld [vmem:[#allocation11 + $0x48] sm:$0xff]
          %v329 = vld [vmem:[#allocation11 + $0x50] sm:$0xff]
          %v330 = vld [vmem:[#allocation11 + $0x58] sm:$0xff]
          %v331 = vld [vmem:[#allocation11 + $0x60] sm:$0xff]
          %v332 = vld [vmem:[#allocation11 + $0x68] sm:$0xff]
          %v333 = vld [vmem:[#allocation11 + $0x70] sm:$0xff]
          %v334 = vld [vmem:[#allocation11 + $0x78] sm:$0xff]
          %335 = vmatpush.msra.mxu0 %v334
          %336 = vmatpush.msra.mxu0 %v333
          %337 = vmatpush.msra.mxu0 %v332
          %338 = vmatpush.msra.mxu0 %v331
          %339 = vmatpush.msra.mxu0 %v330
          %340 = vmatpush.msra.mxu0 %v329
          %341 = vmatpush.msra.mxu0 %v328
          %342 = vmatpush.msra.mxu0 %v327
          %343 = vmatpush.msra.mxu0 %v326
          %344 = vmatpush.msra.mxu0 %v325
          %345 = vmatpush.msra.mxu0 %v324
          %346 = vmatpush.msra.mxu0 %v323
          %347 = vmatpush.msra.mxu0 %v322
          %348 = vmatpush.msra.mxu0 %v321
          %349 = vmatpush.msra.mxu0 %v320
          %350 = vmatpush.msra.mxu0 %v319
          %351 = vmatmul.f32.gmra.mxu0 %v318
          %v352 = vpop.f32.mrf.mxu0
          %v353 = vadd.f32 0.0, %v352
          %354 = vdwg.mxu0
          %v355 = vmul.f32 %v353, 0.088388346
          %356 = vst [vmem:[#allocation2] sm:$0xff] %v355
          %vm357 = vcmask 7168
          %358 = vst.msk [vmem:[#allocation3] sm:$0xff] %vm357, -1e+30
          %359 = vst.msk [vmem:[#allocation4] sm:$0xff] %vm357, 0.0
          %360 = vst [vmem:[#allocation5] sm:$0xff] 0.0
        $region56: #{tpu_custom_call.1} parent=35 // pred_fallthru
          _
        %v361 = vld [vmem:[%s273] sm:$0xff]
        %v362 = vld [vmem:[#allocation12] sm:$0xff]
        %v363 = vld [vmem:[#allocation12 + $0x8] sm:$0xff]
        %v364 = vld [vmem:[#allocation12 + $0x10] sm:$0xff]
        %v365 = vld [vmem:[#allocation12 + $0x18] sm:$0xff]
        %v366 = vld [vmem:[#allocation12 + $0x20] sm:$0xff]
        %v367 = vld [vmem:[#allocation12 + $0x28] sm:$0xff]
        %v368 = vld [vmem:[#allocation12 + $0x30] sm:$0xff]
        %v369 = vld [vmem:[#allocation12 + $0x38] sm:$0xff]
        %v370 = vld [vmem:[#allocation12 + $0x40] sm:$0xff]
        %v371 = vld [vmem:[#allocation12 + $0x48] sm:$0xff]
        %v372 = vld [vmem:[#allocation12 + $0x50] sm:$0xff]
        %v373 = vld [vmem:[#allocation12 + $0x58] sm:$0xff]
        %v374 = vld [vmem:[#allocation12 + $0x60] sm:$0xff]
        %v375 = vld [vmem:[#allocation12 + $0x68] sm:$0xff]
        %v376 = vld [vmem:[#allocation12 + $0x70] sm:$0xff]
        %v377 = vld [vmem:[#allocation12 + $0x78] sm:$0xff]
        %v378 = vld [vmem:[#allocation12 + $0x80] sm:$0xff]
        %v379 = vld [vmem:[#allocation12 + $0x88] sm:$0xff]
        %v380 = vld [vmem:[#allocation12 + $0x90] sm:$0xff]
        %v381 = vld [vmem:[#allocation12 + $0x98] sm:$0xff]
        %v382 = vld [vmem:[#allocation12 + $0xa0] sm:$0xff]
        %v383 = vld [vmem:[#allocation12 + $0xa8] sm:$0xff]
        %v384 = vld [vmem:[#allocation12 + $0xb0] sm:$0xff]
        %v385 = vld [vmem:[#allocation12 + $0xb8] sm:$0xff]
        %v386 = vld [vmem:[#allocation12 + $0xc0] sm:$0xff]
        %v387 = vld [vmem:[#allocation12 + $0xc8] sm:$0xff]
        %v388 = vld [vmem:[#allocation12 + $0xd0] sm:$0xff]
        %v389 = vld [vmem:[#allocation12 + $0xd8] sm:$0xff]
        %v390 = vld [vmem:[#allocation12 + $0xe0] sm:$0xff]
        %v391 = vld [vmem:[#allocation12 + $0xe8] sm:$0xff]
        %v392 = vld [vmem:[#allocation12 + $0xf0] sm:$0xff]
        %v393 = vld [vmem:[#allocation12 + $0xf8] sm:$0xff]
        %394 = vmatpush.msra.mxu0 %v392
        %395 = vmatpush.msra.mxu0 %v390
        %396 = vmatpush.msra.mxu0 %v388
        %397 = vmatpush.msra.mxu0 %v386
        %398 = vmatpush.msra.mxu0 %v384
        %399 = vmatpush.msra.mxu0 %v382
        %400 = vmatpush.msra.mxu0 %v380
        %401 = vmatpush.msra.mxu0 %v378
        %402 = vmatpush.msra.mxu0 %v376
        %403 = vmatpush.msra.mxu0 %v374
        %404 = vmatpush.msra.mxu0 %v372
        %405 = vmatpush.msra.mxu0 %v370
        %406 = vmatpush.msra.mxu0 %v368
        %407 = vmatpush.msra.mxu0 %v366
        %408 = vmatpush.msra.mxu0 %v364
        %409 = vmatpush.msra.mxu0 %v362
        %410 = vmatmul.f32.gmra.mxu0 %v361
        %v411 = vpop.f32.mrf.mxu0
        %v412 = vadd.f32 0.0, %v411
        %413 = vdwg.mxu0
        %414 = vmatpush.msra.mxu0 %v393
        %415 = vmatpush.msra.mxu0 %v391
        %416 = vmatpush.msra.mxu0 %v389
        %417 = vmatpush.msra.mxu0 %v387
        %418 = vmatpush.msra.mxu0 %v385
        %419 = vmatpush.msra.mxu0 %v383
        %420 = vmatpush.msra.mxu0 %v381
        %421 = vmatpush.msra.mxu0 %v379
        %422 = vmatpush.msra.mxu0 %v377
        %423 = vmatpush.msra.mxu0 %v375
        %424 = vmatpush.msra.mxu0 %v373
        %425 = vmatpush.msra.mxu0 %v371
        %426 = vmatpush.msra.mxu0 %v369
        %427 = vmatpush.msra.mxu0 %v367
        %428 = vmatpush.msra.mxu0 %v365
        %429 = vmatpush.msra.mxu0 %v363
        %430 = vmatmul.f32.gmra.mxu0 %v361
        %v431 = vpop.f32.mrf.mxu0
        %v432 = vadd.f32 0.0, %v431
        %433 = vdwg.mxu0
        %v434 = vld [vmem:[#allocation2] sm:$0xff]
        %435 = vmatpush.xpose.msra.mxu0 0.0
        %436 = vmatpush.xpose.msra.mxu0 0.0
        %437 = vmatpush.xpose.msra.mxu0 0.0
        %438 = vmatpush.xpose.msra.mxu0 0.0
        %439 = vmatpush.xpose.msra.mxu0 0.0
        %440 = vmatpush.xpose.msra.mxu0 0.0
        %441 = vmatpush.xpose.msra.mxu0 0.0
        %442 = vmatpush.xpose.msra.mxu0 0.0
        %443 = vmatpush.xpose.msra.mxu0 0.0
        %444 = vmatpush.xpose.msra.mxu0 0.0
        %445 = vmatpush.xpose.msra.mxu0 0.0
        %446 = vmatpush.xpose.msra.mxu0 0.0
        %447 = vmatpush.xpose.msra.mxu0 0.0
        %448 = vmatpush.xpose.msra.mxu0 0.0
        %449 = vmatpush.xpose.msra.mxu0 0.0
        %450 = vmatpush.xpose.msra.mxu0 %v412
        %451 = vmatmul.f32.gmra.mxu0 %v434
        %v452 = vpop.f32.mrf.mxu0
        %v453 = vadd.f32 0.0, %v452
        %454 = vdwg.mxu0
        %v455 = vld [vmem:[#allocation3] sm:$0xff]
        %vm456 = vcmask 64512
        %v457 = vsel %vm456, %v453, -inf
        %458 = vmax.xlane.f32.xlu0 %v457
        %v459 = vpop.xlane.xlu0 %458
        %v460 = vmax.f32 %v455, %v459
        %v461 = vsub.f32 %v455, %v460
        %v462 = vmul.f32 %v461, 1.442695
        %v463 = vpow.pop %v462
        %465 = vset.pattern.permute.xlu0 0
        %466 = vperm.xlu0 %465, %v460
        %v467 = vpop.permute.xlu0 %466
        %v469 = vsub.f32 %v453, %v467
        %v470 = vmul.f32 %v469, 1.442695
        %v471 = vpow.pop %v470
        %v472 = vld [vmem:[#allocation4] sm:$0xff]
        %v473 = vmul.f32 %v463, %v472
        %v474 = vsel %vm456, %v471, 0.0
        %475 = vadd.xlane.f32.xlu0 %v474
        %v476 = vpop.xlane.xlu0 %475
        %v477 = vadd.f32 %v473, %v476
        %vm478 = vcmask 7168
        %479 = vst.msk [vmem:[#allocation4] sm:$0xff] %vm478, %v477
        %v480 = vld [vmem:[#allocation5] sm:$0xff]
        %482 = vset.pattern.permute.xlu0 0
        %483 = vperm.xlu0 %482, %v463
        %v484 = vpop.permute.xlu0 %483
        %v486 = vmul.f32 %v484, %v480
        %v488 = vsel %vm456, %v471, 0
        %490 = vmatpush.msra.mxu0 0.0
        %491 = vmatpush.msra.mxu0 0.0
        %492 = vmatpush.msra.mxu0 0.0
        %493 = vmatpush.msra.mxu0 0.0
        %494 = vmatpush.msra.mxu0 0.0
        %495 = vmatpush.msra.mxu0 0.0
        %496 = vmatpush.msra.mxu0 0.0
        %497 = vmatpush.msra.mxu0 0.0
        %498 = vmatpush.msra.mxu0 0.0
        %499 = vmatpush.msra.mxu0 0.0
        %500 = vmatpush.msra.mxu0 0.0
        %501 = vmatpush.msra.mxu0 0.0
        %502 = vmatpush.msra.mxu0 0.0
        %503 = vmatpush.msra.mxu0 0.0
        %504 = vmatpush.msra.mxu0 0.0
        %505 = vmatpush.msra.mxu0 %v432
        %506 = vmatmul.f32.gmra.mxu0 %v488
        %v507 = vpop.f32.mrf.mxu0
        %v508 = vadd.f32 0.0, %v507
        %509 = vdwg.mxu0
        %v510 = vadd.f32 %v486, %v508
        %511 = vst [vmem:[#allocation5] sm:$0xff] %v510
        %512 = vst.msk [vmem:[#allocation3] sm:$0xff] %vm478, %v460
        // Predicated region
        $region57: #{tpu_custom_call.1} parent=35 // pred_check
          %p513 = pneg %p314
        $region58: #{tpu_custom_call.1} parent=35 // pred_check_branch
          %515 = sbr.rel (%p513) target = $region60
        $region59: #{tpu_custom_call.1} parent=35 // pred_region
          %v516 = vld [vmem:[#allocation4] sm:$0xff]
          %v517 = vrcp.pop %v516
          %v518 = vld [vmem:[#allocation5] sm:$0xff]
          %520 = vset.pattern.permute.xlu0 0
          %521 = vperm.xlu0 %520, %v517
          %v522 = vpop.permute.xlu0 %521
          %v524 = vmul.f32 %v518, %v522
          %525 = vst [vmem:[%s313] sm:$0xff] %v524
        $region60: #{tpu_custom_call.1} parent=35 // pred_fallthru
          _
        %s526 = sand.u32 %s152, 1
        %s527 = scalar_lea.sflag [#allocation8], %s526
        %s528 = sand.u32 %s152, 1
        %s529 = smul.addr %s528, 8
        %s530 = scalar_lea.vmem [#allocation14], %s529
        // Predicated region
        $region61: #{tpu_custom_call.1} parent=35 // pred_check
          %p531 = pneg %p162
        $region62: #{tpu_custom_call.1} parent=35 // pred_check_branch
          %533 = sbr.rel (%p531) target = $region64
        $region63: #{tpu_custom_call.1} parent=35 // pred_region
          %535 = vsyncadd %s527, 0
          %s536 = sadd.s32 %s31, %s30
          %s537 = smul.addr %s536, 8
          %s538 = scalar_lea.hbm %s4, %s537
          %s540 = sshll.u32 %s530, 4
          %s541 = int_to_ptr.vmem [resolvable:$true] %s540
          %s542 = sshll.u32 %s538, 4
          %s543 = int_to_ptr.hbm [resolvable:$true] %s542
          %545 = dma.vmem_to_hbm [thread:$0]  %s541, 128, %s543, %s527
        $region64: #{tpu_custom_call.1} parent=35 // pred_fallthru
          _
      $region36: #{tpu_custom_call.1} parent=5 // pred_fallthru
        _
      %p546 = scmp.le.s32.totalorder 2, %s20
      // Predicated region
      $region65: #{tpu_custom_call.1} parent=5 // pred_check
        %p547 = pneg %p546
      $region66: #{tpu_custom_call.1} parent=5 // pred_check_branch
        %549 = sbr.rel (%p547) target = $region68
      $region67: #{tpu_custom_call.1} parent=5 // pred_region
        %s550 = ssub.s32 %s20, 2
        // Predicated region
        $region69: #{tpu_custom_call.1} parent=67 // pred_check
          %p551 = pneg %p168
        $region70: #{tpu_custom_call.1} parent=67 // pred_check_branch
          %553 = sbr.rel (%p551) target = $region72
        $region71: #{tpu_custom_call.1} parent=67 // pred_region
          %s554 = sand.u32 %s153, 1
          %s555 = scalar_lea.sflag [#allocation8], %s554
          %s556 = sand.u32 %s153, 1
          %s557 = smul.addr %s556, 8
          %s558 = scalar_lea.vmem [#allocation14], %s557
          %560 = dma.done %s555, 128
        $region72: #{tpu_custom_call.1} parent=67 // pred_fallthru
          _
      $region68: #{tpu_custom_call.1} parent=5 // pred_fallthru
        _
    $region6: #{tpu_custom_call.1} parent=1 // loop_footer
      %s24 = sadd.s32 1, %s20
    $region7: #{tpu_custom_call.1} parent=1 // loop_footer_branch
      %19 = sbr.rel target = $region3
    $region8: #{tpu_custom_call.1} parent=1 // loop_exit
      _
    %561 = vsyncpa [#allocation7], 1
    %s562 = scalar_lea.sflag [#allocation7], 1
    %563 = vsyncpa %s562, 1
    %564 = vsyncpa [#allocation10], 1
    %s565 = scalar_lea.sflag [#allocation10], 1
    %566 = vsyncpa %s565, 1
    %567 = vsyncpa [#allocation13], 1
    %568 = vsyncpa [#allocation8], 1
    %s569 = scalar_lea.sflag [#allocation8], 1
    %570 = vsyncpa %s569, 1

</llo_original>
